<compile_context>
chip_gen: v5e
topology: v5e:2x2
jax: 0.10.0
libtpu: 0.0.40
codegen_flags: <defaults>
</compile_context>

<pallas_src>
import functools

import jax
import jax.numpy as jnp
from jax.experimental import pallas as pl
from jax.experimental.pallas import tpu as pltpu


def _make_kernel(n_inputs):
    """Kernel over refs: (x_0..x_{n-1}, wf_0..wf_{n-1}, bias, w1, w2, out)."""

    def kernel(*refs):
        x_refs = refs[:n_inputs]
        wf_refs = refs[n_inputs:2 * n_inputs]
        bf_ref, w1_ref, w2_ref, o_ref = refs[2 * n_inputs:]

        # Fusion Linear with the concat folded in: y = sum_i x_i @ Wf_i + b.
        # Inputs/weights may be bf16; accumulate in f32 on the MXU.
        y = jnp.dot(x_refs[0][...], wf_refs[0][...],
                    preferred_element_type=jnp.float32)
        for xr, wr in zip(x_refs[1:], wf_refs[1:]):
            y = y + jnp.dot(xr[...], wr[...],
                            preferred_element_type=jnp.float32)
        y = y + bf_ref[...].astype(jnp.float32)

        # SENet: squeeze -> ReLU -> excitation -> sigmoid -> gate.
        # Epilogue kept in f32 (v5e has no bf16 VPU/EUP; cheap everywhere).
        g = jnp.dot(y, w1_ref[...].astype(jnp.float32),
                    preferred_element_type=jnp.float32)
        g = jnp.maximum(g, 0.0)
        g = jnp.dot(g, w2_ref[...].astype(jnp.float32),
                    preferred_element_type=jnp.float32)
        g = jax.nn.sigmoid(g)

        o_ref[...] = (y * g).astype(o_ref.dtype)

    return kernel


@functools.partial(jax.jit, static_argnames=("block_b", "storage_dtype"))
def concat_dense_se(inputs, wf_t, bf, w1_t, w2_t, *,
                    block_b=256, storage_dtype=None):
    """Fused ConcatDenseSE forward.

    inputs:  tuple of [B, f_i] arrays (the multimodal embeddings).
    wf_t:    [sum(f_i), H]  fusion weight, pre-transposed (PyTorch stores [H, M]).
    bf:      [H]            fusion bias.
    w1_t:    [H, R]         SE squeeze weight (transposed), no bias.
    w2_t:    [R, H]         SE excitation weight (transposed), no bias.
    Returns  [B, H].
    """
    inputs = tuple(inputs)
    n = len(inputs)
    widths = tuple(int(x.shape[1]) for x in inputs)
    B = int(inputs[0].shape[0])
    M = sum(widths)
    assert wf_t.shape[0] == M, "fusion weight rows must match concat width"
    H = int(wf_t.shape[1])
    R = int(w1_t.shape[1])

    # Optional bf16 storage of activations/weights (halves HBM traffic).
    if storage_dtype is not None:
        inputs = tuple(x.astype(storage_dtype) for x in inputs)
        wf_t = wf_t.astype(storage_dtype)
        w1_t = w1_t.astype(storage_dtype)
        w2_t = w2_t.astype(storage_dtype)
    out_dtype = inputs[0].dtype

    # Split the fusion weight per input -> concat is fused into the matmul.
    offs, acc = [], 0
    for w in widths:
        offs.append(acc)
        acc += w
    wf_chunks = tuple(wf_t[o:o + w, :] for o, w in zip(offs, widths))

    # Pad the SE squeeze dim up to a lane-friendly multiple of 128 (zero
    # columns / zero rows are numerically inert through relu and the matmul).
    Rp = pl.cdiv(R, 128) * 128
    w1_p = jnp.pad(w1_t, ((0, 0), (0, Rp - R)))
    w2_p = jnp.pad(w2_t, ((0, Rp - R), (0, 0)))

    bf2 = bf.reshape(1, H).astype(jnp.float32)

    # Batch tiling: real tile so the pipeline (and both v7x TCs) are used;
    # pad the batch to a tile multiple, slice the pad rows off afterwards.
    if B <= block_b:
        tb, Bp = B, B
    else:
        tb = block_b
        Bp = pl.cdiv(B, tb) * tb
    if Bp != B:
        inputs = tuple(jnp.pad(x, ((0, Bp - B), (0, 0))) for x in inputs)
    grid = (Bp // tb,)

    # Advisory cost estimate so XLA does not mis-schedule this tiny fused op.
    itemsize = jnp.dtype(out_dtype).itemsize
    flops = 2 * Bp * (M * H + H * Rp + Rp * H)
    bytes_accessed = (
        sum(Bp * w * itemsize for w in widths)           # inputs
        + (M * H + H * Rp + Rp * H) * itemsize           # weights
        + H * 4                                          # bias (f32)
        + Bp * H * itemsize                              # output
    )
    cost = pl.CostEstimate(flops=flops,
                           transcendentals=Bp * H,       # sigmoid exp
                           bytes_accessed=bytes_accessed)

    in_specs = (
        [pl.BlockSpec((tb, w), lambda i: (i, 0)) for w in widths]      # x_i tiles
        + [pl.BlockSpec((w, H), lambda i: (0, 0)) for w in widths]     # Wf_i
        + [pl.BlockSpec((1, H), lambda i: (0, 0)),                     # bias
           pl.BlockSpec((H, Rp), lambda i: (0, 0)),                    # W1 (padded)
           pl.BlockSpec((Rp, H), lambda i: (0, 0))]                    # W2 (padded)
    )

    out = pl.pallas_call(
        _make_kernel(n),
        out_shape=jax.ShapeDtypeStruct((Bp, H), out_dtype),
        grid_spec=pltpu.PrefetchScalarGridSpec(
            num_scalar_prefetch=0,
            grid=grid,
            in_specs=in_specs,
            out_specs=pl.BlockSpec((tb, H), lambda i: (i, 0)),
        ),
        compiler_params=pltpu.CompilerParams(
            dimension_semantics=("parallel",)),
        cost_estimate=cost,
    )(*inputs, *wf_chunks, bf2, w1_p, w2_p)

    return out[:B] if Bp != B else out


def _reference(inputs, wf_t, bf, w1_t, w2_t):
    emb = jnp.concatenate([x.astype(jnp.float32) for x in inputs], axis=1)
    y = emb @ wf_t.astype(jnp.float32) + bf.astype(jnp.float32)
    g = jnp.maximum(y @ w1_t.astype(jnp.float32), 0.0)
    g = jax.nn.sigmoid(g @ w2_t.astype(jnp.float32))
    return y * g


if __name__ == "__main__":
    # Module hyper-params (consistent with the forward):
    #   two input modalities of width 32 -> multimodal_hidden_size = 64
    #   hidden_size = 32, se_ratio = 8 -> squeeze dim = 4
    f0, f1 = 32, 32
    multimodal_hidden = f0 + f1
    hidden = 32
    se_ratio = 8
    squeeze = hidden // se_ratio

    key = jax.random.PRNGKey(0)
    k_in0, k_in1, k_wf, k_bf, k_w1, k_w2 = jax.random.split(key, 6)

    # PyTorch Linear weight is [out, in]; we store the transposed [in, out].
    wf_t = (jax.random.normal(k_wf, (multimodal_hidden, hidden), jnp.float32)
            * (1.0 / multimodal_hidden ** 0.5))
    bf = jax.random.normal(k_bf, (hidden,), jnp.float32) * 0.01
    w1_t = (jax.random.normal(k_w1, (hidden, squeeze), jnp.float32)
            * (1.0 / hidden ** 0.5))
    w2_t = (jax.random.normal(k_w2, (squeeze, hidden), jnp.float32)
            * (1.0 / squeeze ** 0.5))

    # --- Test 1: small batch, f32 storage (tight tolerance) -----------------
    batch = 8
    x0 = jax.random.normal(k_in0, (batch, f0), dtype=jnp.float32)
    x1 = jax.random.normal(k_in1, (batch, f1), dtype=jnp.float32)

    out = concat_dense_se((x0, x1), wf_t, bf, w1_t, w2_t)
    out = jax.block_until_ready(out)
    ref = _reference((x0, x1), wf_t, bf, w1_t, w2_t)
    assert out.shape == (batch, hidden)
    assert jnp.allclose(out, ref, atol=1e-5, rtol=1e-5), "f32 mismatch vs reference"

    # --- Test 2: larger ragged batch, bf16 storage, real tiling + padding ---
    big_batch = 1000  # not a multiple of the 256-row tile -> exercises padding
    xb0 = jax.random.normal(k_in0, (big_batch, f0), dtype=jnp.float32)
    xb1 = jax.random.normal(k_in1, (big_batch, f1), dtype=jnp.float32)

    out_bf16 = concat_dense_se((xb0, xb1), wf_t, bf, w1_t, w2_t,
                               block_b=256, storage_dtype=jnp.bfloat16)
    out_bf16 = jax.block_until_ready(out_bf16)
    ref_big = _reference((xb0, xb1), wf_t, bf, w1_t, w2_t)
    assert out_bf16.shape == (big_batch, hidden)
    assert out_bf16.dtype == jnp.bfloat16
    assert jnp.allclose(out_bf16.astype(jnp.float32), ref_big,
                        atol=5e-2, rtol=5e-2), "bf16 mismatch vs reference"

    print("KERNEL_OK")
</pallas_src>

<mosaic_0001>
module attributes {stable_mosaic.version = 11 : i64} {
  func.func @kernel(%arg0: i32, %arg1: memref<8x32xf32, #tpu.memory_space<vmem>>, %arg2: memref<8x32xf32, #tpu.memory_space<vmem>>, %arg3: memref<32x32xf32, #tpu.memory_space<vmem>>, %arg4: memref<32x32xf32, #tpu.memory_space<vmem>>, %arg5: memref<1x32xf32, #tpu.memory_space<vmem>>, %arg6: memref<32x128xf32, #tpu.memory_space<vmem>>, %arg7: memref<128x32xf32, #tpu.memory_space<vmem>>, %arg8: memref<8x32xf32, #tpu.memory_space<vmem>>) attributes {dimension_semantics = [#tpu.dimension_semantics<parallel>], iteration_bounds = array<i64: 1>, scalar_prefetch = 0 : i64, scratch_operands = 0 : i64, tpu.core_type = #tpu.core_type<tc>, window_params = [{transform_indices = @transform_0, window_bounds = array<i64: 8, 32>}, {transform_indices = @transform_1, window_bounds = array<i64: 8, 32>}, {pipeline_mode = #tpu.pipeline_mode<synchronous>, transform_indices = @transform_2, window_bounds = array<i64: 32, 32>}, {pipeline_mode = #tpu.pipeline_mode<synchronous>, transform_indices = @transform_3, window_bounds = array<i64: 32, 32>}, {pipeline_mode = #tpu.pipeline_mode<synchronous>, transform_indices = @transform_4, window_bounds = array<i64: 1, 32>}, {pipeline_mode = #tpu.pipeline_mode<synchronous>, transform_indices = @transform_5, window_bounds = array<i64: 32, 128>}, {pipeline_mode = #tpu.pipeline_mode<synchronous>, transform_indices = @transform_6, window_bounds = array<i64: 128, 32>}, {transform_indices = @transform_7, window_bounds = array<i64: 8, 32>}]} {
    %c0 = arith.constant 0 : index
    %c0_0 = arith.constant 0 : index
    %0 = vector.load %arg1[%c0, %c0_0] : memref<8x32xf32, #tpu.memory_space<vmem>>, vector<8x32xf32>
    %c0_1 = arith.constant 0 : index
    %c0_2 = arith.constant 0 : index
    %1 = vector.load %arg3[%c0_1, %c0_2] : memref<32x32xf32, #tpu.memory_space<vmem>>, vector<32x32xf32>
    %cst = arith.constant dense<0.000000e+00> : vector<8x32xf32>
    %2 = tpu.matmul %0, %1, %cst {dimension_numbers = #tpu.dot_dimension_numbers<[1], [0], [0], [1], [0, 0, 1, 1], [], []>} : vector<8x32xf32>, vector<32x32xf32>, vector<8x32xf32> -> vector<8x32xf32>
    %c0_3 = arith.constant 0 : index
    %c0_4 = arith.constant 0 : index
    %3 = vector.load %arg2[%c0_3, %c0_4] : memref<8x32xf32, #tpu.memory_space<vmem>>, vector<8x32xf32>
    %c0_5 = arith.constant 0 : index
    %c0_6 = arith.constant 0 : index
    %4 = vector.load %arg4[%c0_5, %c0_6] : memref<32x32xf32, #tpu.memory_space<vmem>>, vector<32x32xf32>
    %cst_7 = arith.constant dense<0.000000e+00> : vector<8x32xf32>
    %5 = tpu.matmul %3, %4, %cst_7 {dimension_numbers = #tpu.dot_dimension_numbers<[1], [0], [0], [1], [0, 0, 1, 1], [], []>} : vector<8x32xf32>, vector<32x32xf32>, vector<8x32xf32> -> vector<8x32xf32>
    %6 = arith.addf %2, %5 : vector<8x32xf32>
    %c0_8 = arith.constant 0 : index
    %c0_9 = arith.constant 0 : index
    %7 = vector.load %arg5[%c0_8, %c0_9] : memref<1x32xf32, #tpu.memory_space<vmem>>, vector<1x32xf32>
    %8 = vector.broadcast %7 : vector<1x32xf32> to vector<8x32xf32>
    %9 = arith.addf %6, %8 : vector<8x32xf32>
    %c0_10 = arith.constant 0 : index
    %c0_11 = arith.constant 0 : index
    %10 = vector.load %arg6[%c0_10, %c0_11] : memref<32x128xf32, #tpu.memory_space<vmem>>, vector<32x128xf32>
    %cst_12 = arith.constant dense<0.000000e+00> : vector<8x128xf32>
    %11 = tpu.matmul %9, %10, %cst_12 {dimension_numbers = #tpu.dot_dimension_numbers<[1], [0], [0], [1], [0, 0, 1, 1], [], []>} : vector<8x32xf32>, vector<32x128xf32>, vector<8x128xf32> -> vector<8x128xf32>
    %cst_13 = arith.constant 0.000000e+00 : f32
    %12 = vector.broadcast %cst_13 : f32 to vector<8x128xf32>
    %13 = arith.maximumf %11, %12 : vector<8x128xf32>
    %c0_14 = arith.constant 0 : index
    %c0_15 = arith.constant 0 : index
    %14 = vector.load %arg7[%c0_14, %c0_15] : memref<128x32xf32, #tpu.memory_space<vmem>>, vector<128x32xf32>
    %cst_16 = arith.constant dense<0.000000e+00> : vector<8x32xf32>
    %15 = tpu.matmul %13, %14, %cst_16 {dimension_numbers = #tpu.dot_dimension_numbers<[1], [0], [0], [1], [0, 0, 1, 1], [], []>} : vector<8x128xf32>, vector<128x32xf32>, vector<8x32xf32> -> vector<8x32xf32>
    %16 = arith.negf %15 : vector<8x32xf32>
    %17 = math.exp %16 : vector<8x32xf32>
    %cst_17 = arith.constant 1.000000e+00 : f32
    %18 = vector.broadcast %cst_17 : f32 to vector<8x32xf32>
    %19 = arith.addf %18, %17 : vector<8x32xf32>
    %20 = arith.divf %18, %19 : vector<8x32xf32>
    %21 = arith.mulf %9, %20 : vector<8x32xf32>
    %c0_18 = arith.constant 0 : index
    %c0_19 = arith.constant 0 : index
    %22 = vector.load %arg8[%c0_18, %c0_19] : memref<8x32xf32, #tpu.memory_space<vmem>>, vector<8x32xf32>
    tpu.vector_store %arg8[%c0_18, %c0_19], %21 {strides = array<i32>} : memref<8x32xf32, #tpu.memory_space<vmem>>, vector<8x32xf32>,
    return
  }
  func.func @transform_0(%arg0: i32) -> (i32, i32) {
    %c0_i32 = arith.constant 0 : i32
    %c0_i32_0 = arith.constant 0 : i32
    return %arg0, %c0_i32 : i32, i32
  }
  func.func @transform_1(%arg0: i32) -> (i32, i32) {
    %c0_i32 = arith.constant 0 : i32
    %c0_i32_0 = arith.constant 0 : i32
    return %arg0, %c0_i32 : i32, i32
  }
  func.func @transform_2(%arg0: i32) -> (i32, i32) {
    %c0_i32 = arith.constant 0 : i32
    %c0_i32_0 = arith.constant 0 : i32
    %c0_i32_1 = arith.constant 0 : i32
    return %c0_i32, %c0_i32_0 : i32, i32
  }
  func.func @transform_3(%arg0: i32) -> (i32, i32) {
    %c0_i32 = arith.constant 0 : i32
    %c0_i32_0 = arith.constant 0 : i32
    %c0_i32_1 = arith.constant 0 : i32
    return %c0_i32, %c0_i32_0 : i32, i32
  }
  func.func @transform_4(%arg0: i32) -> (i32, i32) {
    %c0_i32 = arith.constant 0 : i32
    %c0_i32_0 = arith.constant 0 : i32
    %c0_i32_1 = arith.constant 0 : i32
    return %c0_i32, %c0_i32_0 : i32, i32
  }
  func.func @transform_5(%arg0: i32) -> (i32, i32) {
    %c0_i32 = arith.constant 0 : i32
    %c0_i32_0 = arith.constant 0 : i32
    %c0_i32_1 = arith.constant 0 : i32
    return %c0_i32, %c0_i32_0 : i32, i32
  }
  func.func @transform_6(%arg0: i32) -> (i32, i32) {
    %c0_i32 = arith.constant 0 : i32
    %c0_i32_0 = arith.constant 0 : i32
    %c0_i32_1 = arith.constant 0 : i32
    return %c0_i32, %c0_i32_0 : i32, i32
  }
  func.func @transform_7(%arg0: i32) -> (i32, i32) {
    %c0_i32 = arith.constant 0 : i32
    %c0_i32_0 = arith.constant 0 : i32
    return %arg0, %c0_i32 : i32, i32
  }
}

</mosaic_0001>

<llo_original>
// kernel: concat_dense_se.1
$region0: #{concat_dense_se.1}
  #allocation0 [shape = 'u32[]', space=smem, size = 0x4, offset = 0x4, fixed_abs, tag = 'smem constant byte address 0x4 - core index']
  #allocation1 [shape = 'u32[72,128]{1,0:T(1,128)}', space=vmem, size = 0x9000, scoped, tag = 'internal scratch']
  %s0 = inlined_call_operand.vmem [shape: f32[8,32], index: 0, kind: input, shape index: {}]
  %s1 = inlined_call_operand.vmem [shape: f32[8,32], index: 1, kind: input, shape index: {}]
  %s2 = inlined_call_operand.vmem [shape: f32[32,32], index: 2, kind: input, shape index: {}]
  %s3 = inlined_call_operand.vmem [shape: f32[32,32], index: 3, kind: input, shape index: {}]
  %s4 = inlined_call_operand.vmem [shape: f32[1,32], index: 4, kind: input, shape index: {}]
  %s5 = inlined_call_operand.vmem [shape: f32[32,128], index: 5, kind: input, shape index: {}]
  %s6 = inlined_call_operand.vmem [shape: f32[128,32], index: 6, kind: input, shape index: {}]
  %s7 = inlined_call_operand.hbm [shape: f32[8,32], index: 7, kind: output, shape index: {}]
  %s8 = sld [smem:[#allocation0]]
  $region38: #{concat_dense_se.1} parent=0
    _
  %s10 = ssub.s32 1, %s8
  %s11 = scalar_select 0, %s10, %s8
  $region1: #{concat_dense_se.1} parent=0
    #allocation2 [shape = 'u8[4096]{0}', space=vmem, size = 0x1000, scoped, tag = 'output window, operand 0, single buffered']
    #allocation3 [shape = 's32[1]{0}', space=sflag, size = 0x4, scoped, tag = 'scoped memory for concat_dense_se.1']
    %12 = vsyncpa [#allocation3], 0
    // Predicated region
    $region2: #{concat_dense_se.1} parent=1 // pred_check
      _
    $region3: #{concat_dense_se.1} parent=1 // pred_check_branch
      %14 = sbr.rel (0) target = $region5
    $region4: #{concat_dense_se.1} parent=1 // pred_region
      _
    $region5: #{concat_dense_se.1} parent=1 // pred_fallthru
      _
    // Predicated region
    $region6: #{concat_dense_se.1} parent=1 // pred_check
      _
    $region7: #{concat_dense_se.1} parent=1 // pred_check_branch
      %16 = sbr.rel (0) target = $region9
    $region8: #{concat_dense_se.1} parent=1 // pred_region
      _
    $region9: #{concat_dense_se.1} parent=1 // pred_fallthru
      _
    // Predicated region
    $region10: #{concat_dense_se.1} parent=1 // pred_check
      _
    $region11: #{concat_dense_se.1} parent=1 // pred_check_branch
      %18 = sbr.rel (0) target = $region13
    $region12: #{concat_dense_se.1} parent=1 // pred_region
      _
    $region13: #{concat_dense_se.1} parent=1 // pred_fallthru
      _
    // Predicated region
    $region14: #{concat_dense_se.1} parent=1 // pred_check
      _
    $region15: #{concat_dense_se.1} parent=1 // pred_check_branch
      %20 = sbr.rel (0) target = $region17
    $region16: #{concat_dense_se.1} parent=1 // pred_region
      _
    $region17: #{concat_dense_se.1} parent=1 // pred_fallthru
      _
    // Predicated region
    $region18: #{concat_dense_se.1} parent=1 // pred_check
      _
    $region19: #{concat_dense_se.1} parent=1 // pred_check_branch
      %22 = sbr.rel (0) target = $region21
    $region20: #{concat_dense_se.1} parent=1 // pred_region
      _
    $region21: #{concat_dense_se.1} parent=1 // pred_fallthru
      _
    // Predicated region
    $region22: #{concat_dense_se.1} parent=1 // pred_check
      _
    $region23: #{concat_dense_se.1} parent=1 // pred_check_branch
      %24 = sbr.rel (0) target = $region25
    $region24: #{concat_dense_se.1} parent=1 // pred_region
      _
    $region25: #{concat_dense_se.1} parent=1 // pred_fallthru
      _
    // Predicated region
    $region26: #{concat_dense_se.1} parent=1 // pred_check
      _
    $region27: #{concat_dense_se.1} parent=1 // pred_check_branch
      %26 = sbr.rel (0) target = $region29
    $region28: #{concat_dense_se.1} parent=1 // pred_region
      _
    $region29: #{concat_dense_se.1} parent=1 // pred_fallthru
      _
    %v27 = vld [vmem:[%s0] sm:$0xff]
    %v28 = vld [vmem:[%s2] sm:$0xff]
    %v29 = vld [vmem:[%s2 + $0x8] sm:$0xff]
    %v30 = vld [vmem:[%s2 + $0x10] sm:$0xff]
    %v31 = vld [vmem:[%s2 + $0x18] sm:$0xff]
    %v32 = vld [vmem:[%s1] sm:$0xff]
    %v33 = vld [vmem:[%s3] sm:$0xff]
    %v34 = vld [vmem:[%s3 + $0x8] sm:$0xff]
    %v35 = vld [vmem:[%s3 + $0x10] sm:$0xff]
    %v36 = vld [vmem:[%s3 + $0x18] sm:$0xff]
    %vm37 = vcmask 261120
    %v39 = vsel %vm37, %v32, 0
    %41 = vmatpush.msra.mxu0 0.0
    %42 = vmatpush.msra.mxu0 0.0
    %43 = vmatpush.msra.mxu0 0.0
    %44 = vmatpush.msra.mxu0 0.0
    %45 = vmatpush.msra.mxu0 0.0
    %46 = vmatpush.msra.mxu0 0.0
    %47 = vmatpush.msra.mxu0 0.0
    %48 = vmatpush.msra.mxu0 0.0
    %49 = vmatpush.msra.mxu0 0.0
    %50 = vmatpush.msra.mxu0 0.0
    %51 = vmatpush.msra.mxu0 0.0
    %52 = vmatpush.msra.mxu0 0.0
    %53 = vmatpush.msra.mxu0 %v36
    %54 = vmatpush.msra.mxu0 %v35
    %55 = vmatpush.msra.mxu0 %v34
    %56 = vmatpush.msra.mxu0 %v33
    %57 = vmatmul.f32.gmra.mxu0 %v39
    %v58 = vpop.f32.mrf.mxu0
    %v59 = vadd.f32 0.0, %v58
    %60 = vdwg.mxu0
    %v62 = vsel %vm37, %v27, 0
    %64 = vmatpush.msra.mxu0 0.0
    %65 = vmatpush.msra.mxu0 0.0
    %66 = vmatpush.msra.mxu0 0.0
    %67 = vmatpush.msra.mxu0 0.0
    %68 = vmatpush.msra.mxu0 0.0
    %69 = vmatpush.msra.mxu0 0.0
    %70 = vmatpush.msra.mxu0 0.0
    %71 = vmatpush.msra.mxu0 0.0
    %72 = vmatpush.msra.mxu0 0.0
    %73 = vmatpush.msra.mxu0 0.0
    %74 = vmatpush.msra.mxu0 0.0
    %75 = vmatpush.msra.mxu0 0.0
    %76 = vmatpush.msra.mxu0 %v31
    %77 = vmatpush.msra.mxu0 %v30
    %78 = vmatpush.msra.mxu0 %v29
    %79 = vmatpush.msra.mxu0 %v28
    %80 = vmatmul.f32.gmra.mxu0 %v62
    %v81 = vpop.f32.mrf.mxu0
    %v82 = vadd.f32 %v59, %v81
    %83 = vdwg.mxu0
    %v84 = vld [vmem:[%s4] sm:$0x1]
    %v86 = vperm.slane %v84, 0
    %v88 = vadd.f32 %v82, %v86
    %v89 = vld [vmem:[%s5] sm:$0xff]
    %v90 = vld [vmem:[%s5 + $0x8] sm:$0xff]
    %v91 = vld [vmem:[%s5 + $0x10] sm:$0xff]
    %v92 = vld [vmem:[%s5 + $0x18] sm:$0xff]
    %v94 = vsel %vm37, %v88, 0
    %96 = vmatpush.msra.mxu0 0.0
    %97 = vmatpush.msra.mxu0 0.0
    %98 = vmatpush.msra.mxu0 0.0
    %99 = vmatpush.msra.mxu0 0.0
    %100 = vmatpush.msra.mxu0 0.0
    %101 = vmatpush.msra.mxu0 0.0
    %102 = vmatpush.msra.mxu0 0.0
    %103 = vmatpush.msra.mxu0 0.0
    %104 = vmatpush.msra.mxu0 0.0
    %105 = vmatpush.msra.mxu0 0.0
    %106 = vmatpush.msra.mxu0 0.0
    %107 = vmatpush.msra.mxu0 0.0
    %108 = vmatpush.msra.mxu0 %v92
    %109 = vmatpush.msra.mxu0 %v91
    %110 = vmatpush.msra.mxu0 %v90
    %111 = vmatpush.msra.mxu0 %v89
    %112 = vmatmul.f32.gmra.mxu0 %v94
    %v113 = vpop.f32.mrf.mxu0
    %v114 = vadd.f32 0.0, %v113
    %115 = vdwg.mxu0
    %v116 = vmax.f32 %v114, 0.0
    %v117 = vld [vmem:[%s6] sm:$0xff]
    %v118 = vld [vmem:[%s6 + $0x8] sm:$0xff]
    %v119 = vld [vmem:[%s6 + $0x10] sm:$0xff]
    %v120 = vld [vmem:[%s6 + $0x18] sm:$0xff]
    %v121 = vld [vmem:[%s6 + $0x20] sm:$0xff]
    %v122 = vld [vmem:[%s6 + $0x28] sm:$0xff]
    %v123 = vld [vmem:[%s6 + $0x30] sm:$0xff]
    %v124 = vld [vmem:[%s6 + $0x38] sm:$0xff]
    %v125 = vld [vmem:[%s6 + $0x40] sm:$0xff]
    %v126 = vld [vmem:[%s6 + $0x48] sm:$0xff]
    %v127 = vld [vmem:[%s6 + $0x50] sm:$0xff]
    %v128 = vld [vmem:[%s6 + $0x58] sm:$0xff]
    %v129 = vld [vmem:[%s6 + $0x60] sm:$0xff]
    %v130 = vld [vmem:[%s6 + $0x68] sm:$0xff]
    %v131 = vld [vmem:[%s6 + $0x70] sm:$0xff]
    %v132 = vld [vmem:[%s6 + $0x78] sm:$0xff]
    %133 = vmatpush.msra.mxu0 %v132
    %134 = vmatpush.msra.mxu0 %v131
    %135 = vmatpush.msra.mxu0 %v130
    %136 = vmatpush.msra.mxu0 %v129
    %137 = vmatpush.msra.mxu0 %v128
    %138 = vmatpush.msra.mxu0 %v127
    %139 = vmatpush.msra.mxu0 %v126
    %140 = vmatpush.msra.mxu0 %v125
    %141 = vmatpush.msra.mxu0 %v124
    %142 = vmatpush.msra.mxu0 %v123
    %143 = vmatpush.msra.mxu0 %v122
    %144 = vmatpush.msra.mxu0 %v121
    %145 = vmatpush.msra.mxu0 %v120
    %146 = vmatpush.msra.mxu0 %v119
    %147 = vmatpush.msra.mxu0 %v118
    %148 = vmatpush.msra.mxu0 %v117
    %149 = vmatmul.f32.gmra.mxu0 %v116
    %v150 = vpop.f32.mrf.mxu0
    %v151 = vadd.f32 0.0, %v150
    %152 = vdwg.mxu0
    %v153 = vxor.u32 %v151, 2147483648
    %v154 = vmul.f32 %v153, 1.442695
    %v155 = vpow.pop %v154
    %v156 = vadd.f32 %v155, 1.0
    %v157 = vrcp.pop %v156
    %v158 = vmul.f32 %v156, %v157
    %v159 = vsub.f32 1.0, %v158
    %v160 = vmul.f32 %v157, %v159
    %v161 = vadd.f32 %v157, %v160
    %vm162 = vweird.f32 %v156
    %vm163 = vweird.f32 %v157
    %vm164 = vmor %vm162, %vm163
    %v165 = vsel %vm164, %v157, %v161
    %v166 = vand.u32 2147483647, %v156
    %vm167 = vcmp.eq.f32.partialorder %v166, 8.507059e+37
    %v168 = vand.u32 %v156, 2147483648
    %v169 = vor.u32 1.1754944e-38, %v168
    %v170 = vsel %vm167, %v169, %v165
    %v171 = vmul.f32 1.0, %v170
    %v172 = vmul.f32 %v88, %v171
    %173 = vst.msk [vmem:[#allocation2] sm:$0xff] %vm37, %v172
    // Predicated region
    $region30: #{concat_dense_se.1} parent=1 // pred_check
      _
    $region31: #{concat_dense_se.1} parent=1 // pred_check_branch
      %175 = sbr.rel (0) target = $region33
    $region32: #{concat_dense_se.1} parent=1 // pred_region
      %177 = vsyncadd [#allocation3], 0
      %s179 = sshll.u32 [#allocation2], 4
      %s180 = int_to_ptr.vmem [resolvable:$true] %s179
      %s181 = sshll.u32 %s7, 4
      %s182 = int_to_ptr.hbm [resolvable:$true] %s181
      %184 = dma.vmem_to_hbm [thread:$0]  %s180, 128, %s182, [#allocation3]
    $region33: #{concat_dense_se.1} parent=1 // pred_fallthru
      _
    // Predicated region
    $region34: #{concat_dense_se.1} parent=1 // pred_check
      _
    $region35: #{concat_dense_se.1} parent=1 // pred_check_branch
      %186 = sbr.rel (0) target = $region37
    $region36: #{concat_dense_se.1} parent=1 // pred_region
      %188 = dma.done [#allocation3], 128
    $region37: #{concat_dense_se.1} parent=1 // pred_fallthru
      _
    %189 = vsyncpa [#allocation3], 1

</llo_original>
